<compile_context>
chip_gen: v6e
topology: v6e:2x2x1
jax: 0.10.0
libtpu: 0.0.40
codegen_flags: <defaults>
</compile_context>

<pallas_src>
import functools

import jax
import jax.numpy as jnp
from jax.experimental import pallas as pl
from jax.experimental.pallas import tpu as pltpu

LANE = 128
RESIDENT_X_BYTES = 8 * 1024 * 1024  # keep X VMEM-resident below this raw size


def _round_up(n, m):
    return ((n + m - 1) // m) * m


def _choose_tiles(n):
    """Pick (n_pad, tm, tk). Large graphs: 256x512 tiles; small: one tile per axis."""
    n128 = _round_up(max(n, LANE), LANE)
    if n128 >= 512:
        tm, tk = 256, 512
        n_pad = _round_up(n128, 512)   # multiple of both tm and tk; even tm-tile count
    else:
        tm = tk = n128                  # whole padded graph in a single tile per axis
        n_pad = n128
    return n_pad, tm, tk


# --------------------------------------------------------------------------- #
# Kernel: one SAGEConv layer (mean aggregation + lin_l/lin_r epilogue [+ ReLU])
# --------------------------------------------------------------------------- #
def sage_layer_kernel(adj_ref, invd_ref, xk_ref, xs_ref, wl_ref, wr_ref, b_ref,
                      out_ref, acc_ref, *, apply_relu, resident_x, tk):
    k = pl.program_id(1)

    @pl.when(k == 0)
    def _():
        acc_ref[...] = jnp.zeros_like(acc_ref)

    # 1-byte adjacency counts -> bf16 for the MXU (cast cost hides under DMA/MXU).
    adj = adj_ref[...].astype(jnp.float32).astype(jnp.bfloat16)

    if resident_x:
        # X is VMEM-resident for the whole layer; slice the k-th neighbor chunk.
        start = pl.multiple_of(k * tk, LANE)
        xk = xk_ref[pl.ds(start, tk), :]
    else:
        xk = xk_ref[...]

    # Accumulate this row-tile of (counts @ X) over the neighbor-column axis.
    acc_ref[...] += jnp.dot(adj, xk, preferred_element_type=jnp.float32)

    @pl.when(k == pl.num_programs(1) - 1)
    def _():
        # Fold the mean normalization (1/deg per row) into the epilogue.
        agg = (acc_ref[...] * invd_ref[...]).astype(jnp.bfloat16)
        # Concat-free lin_l / lin_r: two dots instead of a (tm, 2*F_in) concat temp.
        h = jnp.dot(agg, wl_ref[...], preferred_element_type=jnp.float32)
        h = h + jnp.dot(xs_ref[...], wr_ref[...], preferred_element_type=jnp.float32)
        h = h + b_ref[...]
        if apply_relu:
            h = jnp.maximum(h, 0.0)
        out_ref[...] = h.astype(out_ref.dtype)


def sage_layer(adj, inv_deg, x, wl, wr, b, *, apply_relu, out_dtype, tm, tk):
    """One SAGEConv layer on padded, lane-dense inputs.

    adj:     (N_pad, N_pad) int8 unnormalized edge counts (adj[i, j] = #edges j->i).
    inv_deg: (N_pad, 1) f32 1/max(deg_in, 1); 0 in padded rows.
    x:       (N_pad, F_in_pad) bf16 node features.
    wl, wr:  (F_in_pad, F_out_pad) bf16 lin_l / lin_r weights.
    b:       (1, F_out_pad) f32 bias (lin_l bias).
    """
    n_pad = adj.shape[0]
    f_in = x.shape[1]
    f_out = wl.shape[1]
    assert n_pad % tm == 0 and n_pad % tk == 0

    grid = (n_pad // tm, n_pad // tk)

    x_bytes = int(x.size) * x.dtype.itemsize
    resident_x = x_bytes <= RESIDENT_X_BYTES
    if resident_x:
        xk_spec = pl.BlockSpec((n_pad, f_in), lambda i, k: (0, 0))   # DMA'd once
        x_stream_bytes = x_bytes
    else:
        xk_spec = pl.BlockSpec((tk, f_in), lambda i, k: (k, 0))      # re-streamed / row tile
        x_stream_bytes = x_bytes * (n_pad // tm)

    out_isz = jnp.dtype(out_dtype).itemsize
    flops = 2 * n_pad * n_pad * f_in + 2 * 2 * n_pad * f_in * f_out
    bytes_accessed = (int(adj.size) * adj.dtype.itemsize
                      + x_stream_bytes
                      + x_bytes                       # self features
                      + int(inv_deg.size) * 4
                      + 2 * f_in * f_out * 2          # wl + wr (bf16)
                      + f_out * 4
                      + n_pad * f_out * out_isz)

    # Rough VMEM need (double-buffered inputs/outputs + scratch); clamp to [32, 56] MiB.
    vmem_est = (2 * tm * tk * adj.dtype.itemsize
                + (2 * x_bytes if resident_x else 2 * tk * f_in * 2)
                + 2 * tm * f_in * 2
                + 2 * 2 * f_in * f_out * 2
                + 2 * f_out * 4
                + 2 * tm * 4
                + 2 * tm * f_out * out_isz
                + tm * f_in * 4)
    vmem_limit = int(min(56 * 2**20, max(32 * 2**20, 2 * vmem_est)))

    kernel = functools.partial(sage_layer_kernel, apply_relu=apply_relu,
                               resident_x=resident_x, tk=tk)

    return pl.pallas_call(
        kernel,
        out_shape=jax.ShapeDtypeStruct((n_pad, f_out), out_dtype),
        grid_spec=pltpu.PrefetchScalarGridSpec(
            num_scalar_prefetch=0,
            grid=grid,
            in_specs=[
                pl.BlockSpec((tm, tk), lambda i, k: (i, k)),          # int8 adjacency tile
                pl.BlockSpec((tm, 1), lambda i, k: (i, 0)),           # per-row 1/deg
                xk_spec,                                              # neighbor feats
                pl.BlockSpec((tm, f_in), lambda i, k: (i, 0)),        # self feats
                pl.BlockSpec((f_in, f_out), lambda i, k: (0, 0)),     # lin_l weight
                pl.BlockSpec((f_in, f_out), lambda i, k: (0, 0)),     # lin_r weight
                pl.BlockSpec((1, f_out), lambda i, k: (0, 0)),        # bias
            ],
            out_specs=pl.BlockSpec((tm, f_out), lambda i, k: (i, 0)),
            scratch_shapes=[pltpu.VMEM((tm, f_in), jnp.float32)],
        ),
        compiler_params=pltpu.CompilerParams(
            dimension_semantics=("parallel", "arbitrary"),
            vmem_limit_bytes=vmem_limit),
        cost_estimate=pl.CostEstimate(flops=int(flops), transcendentals=0,
                                      bytes_accessed=int(bytes_accessed)),
    )(adj, inv_deg, x, x, wl, wr, b)


# --------------------------------------------------------------------------- #
# Glue (plain JAX): adjacency counts, padding
# --------------------------------------------------------------------------- #
def build_adjacency_counts(edge_index, num_nodes):
    """Unnormalized counts A[i, j] = #edges (j -> i), plus per-row 1/max(deg, 1)."""
    src = edge_index[0]
    dst = edge_index[1]
    counts = jnp.zeros((num_nodes, num_nodes), jnp.float32)
    counts = counts.at[dst, src].add(1.0)
    deg = jnp.sum(counts, axis=1, keepdims=True)
    inv_deg = 1.0 / jnp.maximum(deg, 1.0)
    return counts, inv_deg


def _pad2d(a, rows, cols, dtype):
    out = jnp.zeros((rows, cols), dtype)
    return out.at[:a.shape[0], :a.shape[1]].set(a.astype(dtype))


def graphsage_forward(x, edge_index, params):
    n, in_dim = x.shape
    hid_dim = params["wl1"].shape[1]
    out_dim = params["wl2"].shape[1]

    n_pad, tm, tk = _choose_tiles(n)
    in_pad = _round_up(in_dim, LANE)
    hid_pad = _round_up(hid_dim, LANE)
    out_pad = _round_up(out_dim, LANE)

    counts, inv_deg = build_adjacency_counts(edge_index, n)
    adj_p = _pad2d(counts, n_pad, n_pad, jnp.int8)       # 1-byte HBM stream
    invd_p = _pad2d(inv_deg, n_pad, 1, jnp.float32)      # padded rows -> scale 0
    x_p = _pad2d(x, n_pad, in_pad, jnp.bfloat16)

    wl1 = _pad2d(params["wl1"], in_pad, hid_pad, jnp.bfloat16)
    wr1 = _pad2d(params["wr1"], in_pad, hid_pad, jnp.bfloat16)
    b1 = _pad2d(params["bl1"], 1, hid_pad, jnp.float32)
    wl2 = _pad2d(params["wl2"], hid_pad, out_pad, jnp.bfloat16)
    wr2 = _pad2d(params["wr2"], hid_pad, out_pad, jnp.bfloat16)
    b2 = _pad2d(params["bl2"], 1, out_pad, jnp.float32)

    # Layer 1 (+ReLU); h1 stays padded / bf16 in HBM between the two pipelined passes.
    h1 = sage_layer(adj_p, invd_p, x_p, wl1, wr1, b1,
                    apply_relu=True, out_dtype=jnp.bfloat16, tm=tm, tk=tk)
    # Layer 2.
    out = sage_layer(adj_p, invd_p, h1, wl2, wr2, b2,
                     apply_relu=False, out_dtype=jnp.float32, tm=tm, tk=tk)
    return out[:n, :out_dim]


# --------------------------------------------------------------------------- #
# Precision-matched pure-JAX reference (bf16 MXU inputs, f32 accumulation)
# --------------------------------------------------------------------------- #
def reference_forward(x, edge_index, params):
    counts, inv_deg = build_adjacency_counts(edge_index, x.shape[0])
    a = counts.astype(jnp.bfloat16)
    xb = x.astype(jnp.bfloat16)

    agg1 = (jnp.dot(a, xb, preferred_element_type=jnp.float32)
            * inv_deg).astype(jnp.bfloat16)
    h1 = (jnp.dot(agg1, params["wl1"].astype(jnp.bfloat16),
                  preferred_element_type=jnp.float32)
          + jnp.dot(xb, params["wr1"].astype(jnp.bfloat16),
                    preferred_element_type=jnp.float32)
          + params["bl1"])
    h1 = jnp.maximum(h1, 0.0).astype(jnp.bfloat16)

    agg2 = (jnp.dot(a, h1, preferred_element_type=jnp.float32)
            * inv_deg).astype(jnp.bfloat16)
    out = (jnp.dot(agg2, params["wl2"].astype(jnp.bfloat16),
                   preferred_element_type=jnp.float32)
           + jnp.dot(h1, params["wr2"].astype(jnp.bfloat16),
                     preferred_element_type=jnp.float32)
           + params["bl2"])
    return out


def init_params(key, input_dim, hidden_dim, output_dim):
    ks = jax.random.split(key, 6)
    scale = 0.1
    return {
        # lin_l / lin_r of SAGEConv-1 (stored as (in, out), i.e. transposed vs torch)
        "wl1": scale * jax.random.normal(ks[0], (input_dim, hidden_dim), jnp.float32),
        "bl1": scale * jax.random.normal(ks[1], (1, hidden_dim), jnp.float32),
        "wr1": scale * jax.random.normal(ks[2], (input_dim, hidden_dim), jnp.float32),
        # lin_l / lin_r of SAGEConv-2
        "wl2": scale * jax.random.normal(ks[3], (hidden_dim, output_dim), jnp.float32),
        "bl2": scale * jax.random.normal(ks[4], (1, output_dim), jnp.float32),
        "wr2": scale * jax.random.normal(ks[5], (hidden_dim, output_dim), jnp.float32),
    }


if __name__ == "__main__":
    key = jax.random.PRNGKey(0)
    k_x, k_e, k_p = jax.random.split(key, 3)

    num_nodes = 64
    num_edges = 256
    input_dim, hidden_dim, output_dim = 16, 32, 8

    x = jax.random.normal(k_x, (num_nodes, input_dim), jnp.float32)
    edge_index = jax.random.randint(k_e, (2, num_edges), 0, num_nodes, dtype=jnp.int32)
    params = init_params(k_p, input_dim, hidden_dim, output_dim)

    out = graphsage_forward(x, edge_index, params)
    out = jax.block_until_ready(out)

    ref = reference_forward(x, edge_index, params)
    assert out.shape == (num_nodes, output_dim)
    assert jnp.allclose(out, ref, atol=1e-2, rtol=1e-2), (
        float(jnp.max(jnp.abs(out - ref))))

    print("KERNEL_OK")
</pallas_src>

<mosaic_0001>
module attributes {stable_mosaic.version = 11 : i64} {
  func.func @sage_layer_kernel(%arg0: i32, %arg1: i32, %arg2: memref<128x128xi8, #tpu.memory_space<vmem>>, %arg3: memref<128x1xf32, #tpu.memory_space<vmem>>, %arg4: memref<128x128xbf16, #tpu.memory_space<vmem>>, %arg5: memref<128x128xbf16, #tpu.memory_space<vmem>>, %arg6: memref<128x128xbf16, #tpu.memory_space<vmem>>, %arg7: memref<128x128xbf16, #tpu.memory_space<vmem>>, %arg8: memref<1x128xf32, #tpu.memory_space<vmem>>, %arg9: memref<128x128xbf16, #tpu.memory_space<vmem>>, %arg10: memref<128x128xf32, #tpu.memory_space<vmem>>) attributes {dimension_semantics = [#tpu.dimension_semantics<parallel>, #tpu.dimension_semantics<arbitrary>], iteration_bounds = array<i64: 1, 1>, scalar_prefetch = 0 : i64, scratch_operands = 1 : i64, tpu.core_type = #tpu.core_type<tc>, window_params = [{transform_indices = @transform_0, window_bounds = array<i64: 128, 128>}, {transform_indices = @transform_1, window_bounds = array<i64: 128, 1>}, {pipeline_mode = #tpu.pipeline_mode<synchronous>, transform_indices = @transform_2, window_bounds = array<i64: 128, 128>}, {transform_indices = @transform_3, window_bounds = array<i64: 128, 128>}, {pipeline_mode = #tpu.pipeline_mode<synchronous>, transform_indices = @transform_4, window_bounds = array<i64: 128, 128>}, {pipeline_mode = #tpu.pipeline_mode<synchronous>, transform_indices = @transform_5, window_bounds = array<i64: 128, 128>}, {pipeline_mode = #tpu.pipeline_mode<synchronous>, transform_indices = @transform_6, window_bounds = array<i64: 1, 128>}, {transform_indices = @transform_7, window_bounds = array<i64: 128, 128>}]} {
    %c0_i32 = arith.constant 0 : i32
    %0 = arith.cmpi eq, %arg1, %c0_i32 : i32
    %1 = arith.extui %0 : i1 to i32
    %c0_i32_0 = arith.constant 0 : i32
    %2 = arith.cmpi ne, %1, %c0_i32_0 : i32
    scf.if %2 {
      %cst_9 = arith.constant 0.000000e+00 : f32
      %17 = vector.broadcast %cst_9 : f32 to vector<128x128xf32>
      %c0_10 = arith.constant 0 : index
      %c0_11 = arith.constant 0 : index
      %18 = vector.load %arg10[%c0_10, %c0_11] : memref<128x128xf32, #tpu.memory_space<vmem>>, vector<128x128xf32>
      tpu.vector_store %arg10[%c0_10, %c0_11], %17 {strides = array<i32>} : memref<128x128xf32, #tpu.memory_space<vmem>>, vector<128x128xf32>,
    } else {
    }
    %c0 = arith.constant 0 : index
    %c0_1 = arith.constant 0 : index
    %3 = vector.load %arg2[%c0, %c0_1] : memref<128x128xi8, #tpu.memory_space<vmem>>, vector<128x128xi8>
    %4 = arith.sitofp %3 : vector<128x128xi8> to vector<128x128xf32>
    %5 = arith.truncf %4 : vector<128x128xf32> to vector<128x128xbf16>
    %c128_i32 = arith.constant 128 : i32
    %6 = arith.muli %arg1, %c128_i32 : i32
    %7 = tpu.assume_multiple %6, 128 : i32
    %8 = arith.index_cast %7 : i32 to index
    %c0_2 = arith.constant 0 : index
    %9 = vector.load %arg4[%8, %c0_2] : memref<128x128xbf16, #tpu.memory_space<vmem>>, vector<128x128xbf16>
    %c0_3 = arith.constant 0 : index
    %c0_4 = arith.constant 0 : index
    %10 = vector.load %arg10[%c0_3, %c0_4] : memref<128x128xf32, #tpu.memory_space<vmem>>, vector<128x128xf32>
    %cst = arith.constant dense<0.000000e+00> : vector<128x128xf32>
    %11 = tpu.matmul %5, %9, %cst {dimension_numbers = #tpu.dot_dimension_numbers<[1], [0], [0], [1], [0, 0, 1, 1], [], []>} : vector<128x128xbf16>, vector<128x128xbf16>, vector<128x128xf32> -> vector<128x128xf32>
    %12 = arith.addf %10, %11 : vector<128x128xf32>
    %c0_5 = arith.constant 0 : index
    %c0_6 = arith.constant 0 : index
    %13 = vector.load %arg10[%c0_5, %c0_6] : memref<128x128xf32, #tpu.memory_space<vmem>>, vector<128x128xf32>
    tpu.vector_store %arg10[%c0_5, %c0_6], %12 {strides = array<i32>} : memref<128x128xf32, #tpu.memory_space<vmem>>, vector<128x128xf32>,
    %c0_i32_7 = arith.constant 0 : i32
    %14 = arith.cmpi eq, %arg1, %c0_i32_7 : i32
    %15 = arith.extui %14 : i1 to i32
    %c0_i32_8 = arith.constant 0 : i32
    %16 = arith.cmpi ne, %15, %c0_i32_8 : i32
    scf.if %16 {
      %c0_9 = arith.constant 0 : index
      %c0_10 = arith.constant 0 : index
      %17 = vector.load %arg10[%c0_9, %c0_10] : memref<128x128xf32, #tpu.memory_space<vmem>>, vector<128x128xf32>
      %c0_11 = arith.constant 0 : index
      %c0_12 = arith.constant 0 : index
      %18 = vector.load %arg3[%c0_11, %c0_12] : memref<128x1xf32, #tpu.memory_space<vmem>>, vector<128x1xf32>
      %19 = vector.broadcast %18 : vector<128x1xf32> to vector<128x128xf32>
      %20 = arith.mulf %17, %19 : vector<128x128xf32>
      %21 = arith.truncf %20 : vector<128x128xf32> to vector<128x128xbf16>
      %c0_13 = arith.constant 0 : index
      %c0_14 = arith.constant 0 : index
      %22 = vector.load %arg6[%c0_13, %c0_14] : memref<128x128xbf16, #tpu.memory_space<vmem>>, vector<128x128xbf16>
      %cst_15 = arith.constant dense<0.000000e+00> : vector<128x128xf32>
      %23 = tpu.matmul %21, %22, %cst_15 {dimension_numbers = #tpu.dot_dimension_numbers<[1], [0], [0], [1], [0, 0, 1, 1], [], []>} : vector<128x128xbf16>, vector<128x128xbf16>, vector<128x128xf32> -> vector<128x128xf32>
      %c0_16 = arith.constant 0 : index
      %c0_17 = arith.constant 0 : index
      %24 = vector.load %arg5[%c0_16, %c0_17] : memref<128x128xbf16, #tpu.memory_space<vmem>>, vector<128x128xbf16>
      %c0_18 = arith.constant 0 : index
      %c0_19 = arith.constant 0 : index
      %25 = vector.load %arg7[%c0_18, %c0_19] : memref<128x128xbf16, #tpu.memory_space<vmem>>, vector<128x128xbf16>
      %cst_20 = arith.constant dense<0.000000e+00> : vector<128x128xf32>
      %26 = tpu.matmul %24, %25, %cst_20 {dimension_numbers = #tpu.dot_dimension_numbers<[1], [0], [0], [1], [0, 0, 1, 1], [], []>} : vector<128x128xbf16>, vector<128x128xbf16>, vector<128x128xf32> -> vector<128x128xf32>
      %27 = arith.addf %23, %26 : vector<128x128xf32>
      %c0_21 = arith.constant 0 : index
      %c0_22 = arith.constant 0 : index
      %28 = vector.load %arg8[%c0_21, %c0_22] : memref<1x128xf32, #tpu.memory_space<vmem>>, vector<1x128xf32>
      %29 = vector.broadcast %28 : vector<1x128xf32> to vector<128x128xf32>
      %30 = arith.addf %27, %29 : vector<128x128xf32>
      %cst_23 = arith.constant 0.000000e+00 : f32
      %31 = vector.broadcast %cst_23 : f32 to vector<128x128xf32>
      %32 = arith.maximumf %30, %31 : vector<128x128xf32>
      %33 = arith.truncf %32 : vector<128x128xf32> to vector<128x128xbf16>
      %c0_24 = arith.constant 0 : index
      %c0_25 = arith.constant 0 : index
      %34 = vector.load %arg9[%c0_24, %c0_25] : memref<128x128xbf16, #tpu.memory_space<vmem>>, vector<128x128xbf16>
      tpu.vector_store %arg9[%c0_24, %c0_25], %33 {strides = array<i32>} : memref<128x128xbf16, #tpu.memory_space<vmem>>, vector<128x128xbf16>,
    } else {
    }
    return
  }
  func.func @transform_0(%arg0: i32, %arg1: i32) -> (i32, i32) {
    %c0_i32 = arith.constant 0 : i32
    return %arg0, %arg1 : i32, i32
  }
  func.func @transform_1(%arg0: i32, %arg1: i32) -> (i32, i32) {
    %c0_i32 = arith.constant 0 : i32
    %c0_i32_0 = arith.constant 0 : i32
    return %arg0, %c0_i32 : i32, i32
  }
  func.func @transform_2(%arg0: i32, %arg1: i32) -> (i32, i32) {
    %c0_i32 = arith.constant 0 : i32
    %c0_i32_0 = arith.constant 0 : i32
    %c0_i32_1 = arith.constant 0 : i32
    return %c0_i32, %c0_i32_0 : i32, i32
  }
  func.func @transform_3(%arg0: i32, %arg1: i32) -> (i32, i32) {
    %c0_i32 = arith.constant 0 : i32
    %c0_i32_0 = arith.constant 0 : i32
    return %arg0, %c0_i32 : i32, i32
  }
  func.func @transform_4(%arg0: i32, %arg1: i32) -> (i32, i32) {
    %c0_i32 = arith.constant 0 : i32
    %c0_i32_0 = arith.constant 0 : i32
    %c0_i32_1 = arith.constant 0 : i32
    return %c0_i32, %c0_i32_0 : i32, i32
  }
  func.func @transform_5(%arg0: i32, %arg1: i32) -> (i32, i32) {
    %c0_i32 = arith.constant 0 : i32
    %c0_i32_0 = arith.constant 0 : i32
    %c0_i32_1 = arith.constant 0 : i32
    return %c0_i32, %c0_i32_0 : i32, i32
  }
  func.func @transform_6(%arg0: i32, %arg1: i32) -> (i32, i32) {
    %c0_i32 = arith.constant 0 : i32
    %c0_i32_0 = arith.constant 0 : i32
    %c0_i32_1 = arith.constant 0 : i32
    return %c0_i32, %c0_i32_0 : i32, i32
  }
  func.func @transform_7(%arg0: i32, %arg1: i32) -> (i32, i32) {
    %c0_i32 = arith.constant 0 : i32
    %c0_i32_0 = arith.constant 0 : i32
    return %arg0, %c0_i32 : i32, i32
  }
}

</mosaic_0001>

<llo_original>
// kernel: tpu_custom_call.1
$region0: #{tpu_custom_call.1}
  #allocation0 [shape = 'u32[]', space=smem, size = 0x4, offset = 0x4, fixed_abs, tag = 'smem constant byte address 0x4 - core index']
  #allocation1 [shape = 'u32[144,128]{1,0:T(1,128)}', space=vmem, size = 0x12000, scoped, tag = 'internal scratch']
  #allocation2 [shape = 'f32[128,128]{1,0:T(8,128)}', space=vmem, size = 0x10000, scoped, tag = 'scratch operand']
  %s0 = inlined_call_operand.hbm [shape: s8[128,128], index: 0, kind: input, shape index: {}]
  %s1 = inlined_call_operand.vmem [shape: f32[128,1], index: 1, kind: input, shape index: {}]
  %s2 = inlined_call_operand.vmem [shape: bf16[128,128], index: 2, kind: input, shape index: {}]
  %s3 = inlined_call_operand.vmem [shape: bf16[128,128], index: 3, kind: input, shape index: {}]
  %s4 = inlined_call_operand.hbm [shape: bf16[128,128], index: 4, kind: input, shape index: {}]
  %s5 = inlined_call_operand.hbm [shape: bf16[128,128], index: 5, kind: input, shape index: {}]
  %s6 = inlined_call_operand.vmem [shape: f32[1,128], index: 6, kind: input, shape index: {}]
  %s7 = inlined_call_operand.hbm [shape: bf16[128,128], index: 7, kind: output, shape index: {}]
  %s8 = sld [smem:[#allocation0]]
  $region58: #{tpu_custom_call.1} parent=0
    _
  %s10 = ssub.s32 1, %s8
  %s11 = scalar_select 0, %s10, %s8
  $region1: #{tpu_custom_call.1} parent=0
    #allocation3 [shape = 'u8[16384]{0}', space=vmem, size = 0x4000, scoped, tag = 'input window, operand 0, single buffered']
    #allocation4 [shape = 's32[1]{0}', space=sflag, size = 0x4, scoped, tag = 'scoped memory for tpu_custom_call.1']
    #allocation5 [shape = 's32[1]{0}', space=sflag, size = 0x4, scoped, tag = 'scoped memory for tpu_custom_call.1']
    #allocation6 [shape = 'u8[32768]{0}', space=vmem, size = 0x8000, scoped, tag = 'input window, operand 4, single buffered']
    #allocation7 [shape = 's32[1]{0}', space=sflag, size = 0x4, scoped, tag = 'scoped memory for tpu_custom_call.1']
    #allocation8 [shape = 'u8[32768]{0}', space=vmem, size = 0x8000, scoped, tag = 'input window, operand 5, single buffered']
    #allocation9 [shape = 'u8[32768]{0}', space=vmem, size = 0x8000, scoped, tag = 'output window, operand 0, single buffered']
    %12 = vsyncpa [#allocation4], 0
    %13 = vsyncpa [#allocation7], 0
    %14 = vsyncpa [#allocation5], 0
    // Predicated region
    $region2: #{tpu_custom_call.1} parent=1 // pred_check
      _
    $region3: #{tpu_custom_call.1} parent=1 // pred_check_branch
      %16 = sbr.rel (0) target = $region5
    $region4: #{tpu_custom_call.1} parent=1 // pred_region
      %s18 = ssub.s32 512, 512
      %19 = vsyncadd [#allocation4], %s18
      %s20 = sshll.u32 [#allocation3], 4
      %s21 = int_to_ptr.vmem [resolvable:$true] %s20
      %26 = dma.hbm_to_vmem [thread:$0]  %s0, 512, %s21, [#allocation4], 128, 128, 8
    $region5: #{tpu_custom_call.1} parent=1 // pred_fallthru
      _
    // Predicated region
    $region6: #{tpu_custom_call.1} parent=1 // pred_check
      _
    $region7: #{tpu_custom_call.1} parent=1 // pred_check_branch
      %28 = sbr.rel (0) target = $region9
    $region8: #{tpu_custom_call.1} parent=1 // pred_region
      _
    $region9: #{tpu_custom_call.1} parent=1 // pred_fallthru
      _
    // Predicated region
    $region10: #{tpu_custom_call.1} parent=1 // pred_check
      _
    $region11: #{tpu_custom_call.1} parent=1 // pred_check_branch
      %30 = sbr.rel (0) target = $region13
    $region12: #{tpu_custom_call.1} parent=1 // pred_region
      _
    $region13: #{tpu_custom_call.1} parent=1 // pred_fallthru
      _
    // Predicated region
    $region14: #{tpu_custom_call.1} parent=1 // pred_check
      _
    $region15: #{tpu_custom_call.1} parent=1 // pred_check_branch
      %32 = sbr.rel (0) target = $region17
    $region16: #{tpu_custom_call.1} parent=1 // pred_region
      _
    $region17: #{tpu_custom_call.1} parent=1 // pred_fallthru
      _
    // Predicated region
    $region18: #{tpu_custom_call.1} parent=1 // pred_check
      _
    $region19: #{tpu_custom_call.1} parent=1 // pred_check_branch
      %34 = sbr.rel (0) target = $region21
    $region20: #{tpu_custom_call.1} parent=1 // pred_region
      %s36 = ssub.s32 1024, 1024
      %37 = vsyncadd [#allocation7], %s36
      %s38 = sshll.u32 [#allocation6], 4
      %s39 = int_to_ptr.vmem [resolvable:$true] %s38
      %44 = dma.hbm_to_vmem [thread:$0]  %s4, 1024, %s39, [#allocation7], 64, 64, 4
    $region21: #{tpu_custom_call.1} parent=1 // pred_fallthru
      _
    // Predicated region
    $region22: #{tpu_custom_call.1} parent=1 // pred_check
      _
    $region23: #{tpu_custom_call.1} parent=1 // pred_check_branch
      %46 = sbr.rel (0) target = $region25
    $region24: #{tpu_custom_call.1} parent=1 // pred_region
      %s48 = ssub.s32 1024, 1024
      %49 = vsyncadd [#allocation7], %s48
      %s50 = sshll.u32 [#allocation8], 4
      %s51 = int_to_ptr.vmem [resolvable:$true] %s50
      %56 = dma.hbm_to_vmem [thread:$0]  %s5, 1024, %s51, [#allocation7], 64, 64, 4
    $region25: #{tpu_custom_call.1} parent=1 // pred_fallthru
      _
    // Predicated region
    $region26: #{tpu_custom_call.1} parent=1 // pred_check
      _
    $region27: #{tpu_custom_call.1} parent=1 // pred_check_branch
      %58 = sbr.rel (0) target = $region29
    $region28: #{tpu_custom_call.1} parent=1 // pred_region
      _
    $region29: #{tpu_custom_call.1} parent=1 // pred_fallthru
      _
    // Predicated region
    $region30: #{tpu_custom_call.1} parent=1 // pred_check
      _
    $region31: #{tpu_custom_call.1} parent=1 // pred_check_branch
      %60 = sbr.rel (0) target = $region33
    $region32: #{tpu_custom_call.1} parent=1 // pred_region
      %61 = dma.done [#allocation4], 512
    $region33: #{tpu_custom_call.1} parent=1 // pred_fallthru
      _
    // Predicated region
    $region34: #{tpu_custom_call.1} parent=1 // pred_check
      _
    $region35: #{tpu_custom_call.1} parent=1 // pred_check_branch
      %63 = sbr.rel (0) target = $region37
    $region36: #{tpu_custom_call.1} parent=1 // pred_region
      %64 = dma.done [#allocation7], 1024
    $region37: #{tpu_custom_call.1} parent=1 // pred_fallthru
      _
    // Predicated region
    $region38: #{tpu_custom_call.1} parent=1 // pred_check
      _
    $region39: #{tpu_custom_call.1} parent=1 // pred_check_branch
      %66 = sbr.rel (0) target = $region41
    $region40: #{tpu_custom_call.1} parent=1 // pred_region
      %67 = dma.done [#allocation7], 1024
    $region41: #{tpu_custom_call.1} parent=1 // pred_fallthru
      _
    %p69 = scmp.eq.s32.totalorder 0, 0
    // Predicated region
    $region42: #{tpu_custom_call.1} parent=1 // pred_check
      %p70 = pneg %p69
    $region43: #{tpu_custom_call.1} parent=1 // pred_check_branch
      %72 = sbr.rel (%p70) target = $region45
    $region44: #{tpu_custom_call.1} parent=1 // pred_region
      %73 = vst [vmem:[#allocation2] sm:$0xff] 0.0
      %74 = vst [vmem:[#allocation2 + $0x8] sm:$0xff] 0.0
      %75 = vst [vmem:[#allocation2 + $0x10] sm:$0xff] 0.0
      %76 = vst [vmem:[#allocation2 + $0x18] sm:$0xff] 0.0
      %77 = vst [vmem:[#allocation2 + $0x20] sm:$0xff] 0.0
      %78 = vst [vmem:[#allocation2 + $0x28] sm:$0xff] 0.0
      %79 = vst [vmem:[#allocation2 + $0x30] sm:$0xff] 0.0
      %80 = vst [vmem:[#allocation2 + $0x38] sm:$0xff] 0.0
      %81 = vst [vmem:[#allocation2 + $0x40] sm:$0xff] 0.0
      %82 = vst [vmem:[#allocation2 + $0x48] sm:$0xff] 0.0
      %83 = vst [vmem:[#allocation2 + $0x50] sm:$0xff] 0.0
      %84 = vst [vmem:[#allocation2 + $0x58] sm:$0xff] 0.0
      %85 = vst [vmem:[#allocation2 + $0x60] sm:$0xff] 0.0
      %86 = vst [vmem:[#allocation2 + $0x68] sm:$0xff] 0.0
      %87 = vst [vmem:[#allocation2 + $0x70] sm:$0xff] 0.0
      %88 = vst [vmem:[#allocation2 + $0x78] sm:$0xff] 0.0
    $region45: #{tpu_custom_call.1} parent=1 // pred_fallthru
      _
    %v89 = vld [vmem:[#allocation3] sm:$0xff]
    %v90 = vld [vmem:[#allocation3 + $0x8] sm:$0xff]
    %v91 = vld [vmem:[#allocation3 + $0x10] sm:$0xff]
    %v92 = vld [vmem:[#allocation3 + $0x18] sm:$0xff]
    %v93 = vunpack.c.l.s8.bf16 %v89
    %v94 = vunpack.c.h.s8.bf16 %v89
    %v95 = vunpack.c.l.s8.bf16 %v90
    %v96 = vunpack.c.h.s8.bf16 %v90
    %v97 = vunpack.c.l.s8.bf16 %v91
    %v98 = vunpack.c.h.s8.bf16 %v91
    %v99 = vunpack.c.l.s8.bf16 %v92
    %v100 = vunpack.c.h.s8.bf16 %v92
    %s101 = smul.u32 0, 128
    %s102 = sshra.s32 %s101, 3
    %s103 = sand.u32 %s101, 7
    %s104 = smul.addr %s102, 4
    %s105 = scalar_lea.vmem %s2, %s104
    %v106 = vld [vmem:[%s105] sm:$0xf]
    %v107 = vld [vmem:[%s105 + $0x4] sm:$0xf]
    %v108 = vld [vmem:[%s105 + $0x8] sm:$0xf]
    %v109 = vld [vmem:[%s105 + $0xc] sm:$0xf]
    %v110 = vld [vmem:[%s105 + $0x10] sm:$0xf]
    %v111 = vld [vmem:[%s105 + $0x14] sm:$0xf]
    %v112 = vld [vmem:[%s105 + $0x18] sm:$0xf]
    %v113 = vld [vmem:[%s105 + $0x1c] sm:$0xf]
    %v114 = vld [vmem:[%s105 + $0x20] sm:$0xf]
    %v115 = vld [vmem:[%s105 + $0x24] sm:$0xf]
    %v116 = vld [vmem:[%s105 + $0x28] sm:$0xf]
    %v117 = vld [vmem:[%s105 + $0x2c] sm:$0xf]
    %v118 = vld [vmem:[%s105 + $0x30] sm:$0xf]
    %v119 = vld [vmem:[%s105 + $0x34] sm:$0xf]
    %v120 = vld [vmem:[%s105 + $0x38] sm:$0xf]
    %v121 = vld [vmem:[%s105 + $0x3c] sm:$0xf]
    %v122 = vld [vmem:[#allocation2] sm:$0xff]
    %v123 = vld [vmem:[#allocation2 + $0x8] sm:$0xff]
    %v124 = vld [vmem:[#allocation2 + $0x10] sm:$0xff]
    %v125 = vld [vmem:[#allocation2 + $0x18] sm:$0xff]
    %v126 = vld [vmem:[#allocation2 + $0x20] sm:$0xff]
    %v127 = vld [vmem:[#allocation2 + $0x28] sm:$0xff]
    %v128 = vld [vmem:[#allocation2 + $0x30] sm:$0xff]
    %v129 = vld [vmem:[#allocation2 + $0x38] sm:$0xff]
    %v130 = vld [vmem:[#allocation2 + $0x40] sm:$0xff]
    %v131 = vld [vmem:[#allocation2 + $0x48] sm:$0xff]
    %v132 = vld [vmem:[#allocation2 + $0x50] sm:$0xff]
    %v133 = vld [vmem:[#allocation2 + $0x58] sm:$0xff]
    %v134 = vld [vmem:[#allocation2 + $0x60] sm:$0xff]
    %v135 = vld [vmem:[#allocation2 + $0x68] sm:$0xff]
    %v136 = vld [vmem:[#allocation2 + $0x70] sm:$0xff]
    %v137 = vld [vmem:[#allocation2 + $0x78] sm:$0xff]
    %v154 = vunpack.c.l.b16 %v106
    %v155 = vunpack.c.l.b16 %v107
    %v156 = vunpack.c.l.b16 %v108
    %v157 = vunpack.c.l.b16 %v109
    %v158 = vunpack.c.l.b16 %v110
    %v159 = vunpack.c.l.b16 %v111
    %v160 = vunpack.c.l.b16 %v112
    %v161 = vunpack.c.l.b16 %v113
    %v162 = vunpack.c.l.b16 %v114
    %v163 = vunpack.c.l.b16 %v115
    %v164 = vunpack.c.l.b16 %v116
    %v165 = vunpack.c.l.b16 %v117
    %v166 = vunpack.c.l.b16 %v118
    %v167 = vunpack.c.l.b16 %v119
    %v168 = vunpack.c.l.b16 %v120
    %v169 = vunpack.c.l.b16 %v121
    %v170 = vpack.c.b16 %v155, %v154
    %v171 = vpack.c.b16 %v157, %v156
    %v172 = vpack.c.b16 %v159, %v158
    %v173 = vpack.c.b16 %v161, %v160
    %v174 = vpack.c.b16 %v163, %v162
    %v175 = vpack.c.b16 %v165, %v164
    %v176 = vpack.c.b16 %v167, %v166
    %v177 = vpack.c.b16 %v169, %v168
    %186 = vmatprep.subr.bf16.mxu0 0
    %187 = vmatpush1.bf16.msra.mxu0 %v177
    %188 = vmatprep.subr.bf16.mxu0 0
    %189 = vmatpush1.bf16.msra.mxu0 %v176
    %190 = vmatprep.subr.bf16.mxu0 0
    %191 = vmatpush1.bf16.msra.mxu0 %v175
    %192 = vmatprep.subr.bf16.mxu0 0
    %193 = vmatpush1.bf16.msra.mxu0 %v174
    %194 = vmatprep.subr.bf16.mxu0 0
    %195 = vmatpush1.bf16.msra.mxu0 %v173
    %196 = vmatprep.subr.bf16.mxu0 0
    %197 = vmatpush1.bf16.msra.mxu0 %v172
    %198 = vmatprep.subr.bf16.mxu0 0
    %199 = vmatpush1.bf16.msra.mxu0 %v171
    %200 = vmatprep.subr.bf16.mxu0 0
    %201 = vmatpush1.bf16.msra.mxu0 %v170
    %202 = vmatprep.subr.bf16.mxu0 0
    %203 = vmatpush2.bf16.msra.mxu0 0
    %204 = vmatprep.subr.bf16.mxu0 0
    %205 = vmatpush2.bf16.msra.mxu0 0
    %206 = vmatprep.subr.bf16.mxu0 0
    %207 = vmatpush2.bf16.msra.mxu0 0
    %208 = vmatprep.subr.bf16.mxu0 0
    %209 = vmatpush2.bf16.msra.mxu0 0
    %210 = vmatprep.subr.bf16.mxu0 0
    %211 = vmatpush2.bf16.msra.mxu0 0
    %212 = vmatprep.subr.bf16.mxu0 0
    %213 = vmatpush2.bf16.msra.mxu0 0
    %214 = vmatprep.subr.bf16.mxu0 0
    %215 = vmatpush2.bf16.msra.mxu0 0
    %216 = vmatprep.subr.bf16.mxu0 0
    %217 = vmatpush2.bf16.msra.mxu0 0
    %218 = vmatprep.mubr.bf16.mxu0 0
    %219 = vmatmul.mubr.bf16.gmra.mxu0 %v93
    %v220 = vpop.f32.mrf.mxu0
    %v221 = vadd.f32 0.0, %v220
    %v222 = vpop.f32.mrf.mxu0
    %v223 = vpop.f32.mrf.mxu0
    %v224 = vadd.f32 0.0, %v223
    %v225 = vpop.f32.mrf.mxu0
    %226 = vmatprep.mubr.bf16.mxu0 0
    %227 = vmatmul.mubr.bf16.gmra.mxu0 %v94
    %v228 = vpop.f32.mrf.mxu0
    %v229 = vadd.f32 0.0, %v228
    %v230 = vpop.f32.mrf.mxu0
    %v231 = vpop.f32.mrf.mxu0
    %v232 = vadd.f32 0.0, %v231
    %v233 = vpop.f32.mrf.mxu0
    %234 = vmatprep.mubr.bf16.mxu0 0
    %235 = vmatmul.mubr.bf16.gmra.mxu0 %v95
    %v236 = vpop.f32.mrf.mxu0
    %v237 = vadd.f32 0.0, %v236
    %v238 = vpop.f32.mrf.mxu0
    %v239 = vpop.f32.mrf.mxu0
    %v240 = vadd.f32 0.0, %v239
    %v241 = vpop.f32.mrf.mxu0
    %242 = vmatprep.mubr.bf16.mxu0 0
    %243 = vmatmul.mubr.bf16.gmra.mxu0 %v96
    %v244 = vpop.f32.mrf.mxu0
    %v245 = vadd.f32 0.0, %v244
    %v246 = vpop.f32.mrf.mxu0
    %v247 = vpop.f32.mrf.mxu0
    %v248 = vadd.f32 0.0, %v247
    %v249 = vpop.f32.mrf.mxu0
    %250 = vmatprep.mubr.bf16.mxu0 0
    %251 = vmatmul.mubr.bf16.gmra.mxu0 %v97
    %v252 = vpop.f32.mrf.mxu0
    %v253 = vadd.f32 0.0, %v252
    %v254 = vpop.f32.mrf.mxu0
    %v255 = vpop.f32.mrf.mxu0
    %v256 = vadd.f32 0.0, %v255
    %v257 = vpop.f32.mrf.mxu0
    %258 = vmatprep.mubr.bf16.mxu0 0
    %259 = vmatmul.mubr.bf16.gmra.mxu0 %v98
    %v260 = vpop.f32.mrf.mxu0
    %v261 = vadd.f32 0.0, %v260
    %v262 = vpop.f32.mrf.mxu0
    %v263 = vpop.f32.mrf.mxu0
    %v264 = vadd.f32 0.0, %v263
    %v265 = vpop.f32.mrf.mxu0
    %266 = vmatprep.mubr.bf16.mxu0 0
    %267 = vmatmul.mubr.bf16.gmra.mxu0 %v99
    %v268 = vpop.f32.mrf.mxu0
    %v269 = vadd.f32 0.0, %v268
    %v270 = vpop.f32.mrf.mxu0
    %v271 = vpop.f32.mrf.mxu0
    %v272 = vadd.f32 0.0, %v271
    %v273 = vpop.f32.mrf.mxu0
    %274 = vmatprep.mubr.bf16.mxu0 0
    %275 = vmatmul.mubr.bf16.gmra.mxu0 %v100
    %v276 = vpop.f32.mrf.mxu0
    %v277 = vadd.f32 0.0, %v276
    %v278 = vpop.f32.mrf.mxu0
    %v279 = vpop.f32.mrf.mxu0
    %v280 = vadd.f32 0.0, %v279
    %v281 = vpop.f32.mrf.mxu0
    %282 = vdwg.mxu0
    %v283 = vadd.f32 %v122, %v221
    %v284 = vadd.f32 %v123, %v224
    %v285 = vadd.f32 %v124, %v229
    %v286 = vadd.f32 %v125, %v232
    %v287 = vadd.f32 %v126, %v237
    %v288 = vadd.f32 %v127, %v240
    %v289 = vadd.f32 %v128, %v245
    %v290 = vadd.f32 %v129, %v248
    %v291 = vadd.f32 %v130, %v253
    %v292 = vadd.f32 %v131, %v256
    %v293 = vadd.f32 %v132, %v261
    %v294 = vadd.f32 %v133, %v264
    %v295 = vadd.f32 %v134, %v269
    %v296 = vadd.f32 %v135, %v272
    %v297 = vadd.f32 %v136, %v277
    %v298 = vadd.f32 %v137, %v280
    %299 = vst [vmem:[#allocation2] sm:$0xff] %v283
    %300 = vst [vmem:[#allocation2 + $0x8] sm:$0xff] %v284
    %301 = vst [vmem:[#allocation2 + $0x10] sm:$0xff] %v285
    %302 = vst [vmem:[#allocation2 + $0x18] sm:$0xff] %v286
    %303 = vst [vmem:[#allocation2 + $0x20] sm:$0xff] %v287
    %304 = vst [vmem:[#allocation2 + $0x28] sm:$0xff] %v288
    %305 = vst [vmem:[#allocation2 + $0x30] sm:$0xff] %v289
    %306 = vst [vmem:[#allocation2 + $0x38] sm:$0xff] %v290
    %307 = vst [vmem:[#allocation2 + $0x40] sm:$0xff] %v291
    %308 = vst [vmem:[#allocation2 + $0x48] sm:$0xff] %v292
    %309 = vst [vmem:[#allocation2 + $0x50] sm:$0xff] %v293
    %310 = vst [vmem:[#allocation2 + $0x58] sm:$0xff] %v294
    %311 = vst [vmem:[#allocation2 + $0x60] sm:$0xff] %v295
    %312 = vst [vmem:[#allocation2 + $0x68] sm:$0xff] %v296
    %313 = vst [vmem:[#allocation2 + $0x70] sm:$0xff] %v297
    %314 = vst [vmem:[#allocation2 + $0x78] sm:$0xff] %v298
    // Predicated region
    $region46: #{tpu_custom_call.1} parent=1 // pred_check
      %p315 = pneg %p69
    $region47: #{tpu_custom_call.1} parent=1 // pred_check_branch
      %317 = sbr.rel (%p315) target = $region49
    $region48: #{tpu_custom_call.1} parent=1 // pred_region
      %v318 = vld [vmem:[#allocation2] sm:$0xff]
      %v319 = vld [vmem:[#allocation2 + $0x8] sm:$0xff]
      %v320 = vld [vmem:[#allocation2 + $0x10] sm:$0xff]
      %v321 = vld [vmem:[#allocation2 + $0x18] sm:$0xff]
      %v322 = vld [vmem:[#allocation2 + $0x20] sm:$0xff]
      %v323 = vld [vmem:[#allocation2 + $0x28] sm:$0xff]
      %v324 = vld [vmem:[#allocation2 + $0x30] sm:$0xff]
      %v325 = vld [vmem:[#allocation2 + $0x38] sm:$0xff]
      %v326 = vld [vmem:[#allocation2 + $0x40] sm:$0xff]
      %v327 = vld [vmem:[#allocation2 + $0x48] sm:$0xff]
      %v328 = vld [vmem:[#allocation2 + $0x50] sm:$0xff]
      %v329 = vld [vmem:[#allocation2 + $0x58] sm:$0xff]
      %v330 = vld [vmem:[#allocation2 + $0x60] sm:$0xff]
      %v331 = vld [vmem:[#allocation2 + $0x68] sm:$0xff]
      %v332 = vld [vmem:[#allocation2 + $0x70] sm:$0xff]
      %v333 = vld [vmem:[#allocation2 + $0x78] sm:$0xff]
      %v334 = vld [vmem:[%s1] sm:$0xff]
      %v335 = vld [vmem:[%s1 + $0x8] sm:$0xff]
      %v336 = vld [vmem:[%s1 + $0x10] sm:$0xff]
      %v337 = vld [vmem:[%s1 + $0x18] sm:$0xff]
      %v338 = vld [vmem:[%s1 + $0x20] sm:$0xff]
      %v339 = vld [vmem:[%s1 + $0x28] sm:$0xff]
      %v340 = vld [vmem:[%s1 + $0x30] sm:$0xff]
      %v341 = vld [vmem:[%s1 + $0x38] sm:$0xff]
      %v342 = vld [vmem:[%s1 + $0x40] sm:$0xff]
      %v343 = vld [vmem:[%s1 + $0x48] sm:$0xff]
      %v344 = vld [vmem:[%s1 + $0x50] sm:$0xff]
      %v345 = vld [vmem:[%s1 + $0x58] sm:$0xff]
      %v346 = vld [vmem:[%s1 + $0x60] sm:$0xff]
      %v347 = vld [vmem:[%s1 + $0x68] sm:$0xff]
      %v348 = vld [vmem:[%s1 + $0x70] sm:$0xff]
      %v349 = vld [vmem:[%s1 + $0x78] sm:$0xff]
      %351 = vset.pattern.permute.xlu0 0
      %352 = vperm.xlu0 %351, %v334
      %v353 = vpop.permute.xlu0 %352
      %356 = vset.pattern.permute.xlu0 0
      %357 = vperm.xlu0 %356, %v335
      %v358 = vpop.permute.xlu0 %357
      %361 = vset.pattern.permute.xlu0 0
      %362 = vperm.xlu0 %361, %v336
      %v363 = vpop.permute.xlu0 %362
      %366 = vset.pattern.permute.xlu0 0
      %367 = vperm.xlu0 %366, %v337
      %v368 = vpop.permute.xlu0 %367
      %371 = vset.pattern.permute.xlu0 0
      %372 = vperm.xlu0 %371, %v338
      %v373 = vpop.permute.xlu0 %372
      %376 = vset.pattern.permute.xlu0 0
      %377 = vperm.xlu0 %376, %v339
      %v378 = vpop.permute.xlu0 %377
      %381 = vset.pattern.permute.xlu0 0
      %382 = vperm.xlu0 %381, %v340
      %v383 = vpop.permute.xlu0 %382
      %386 = vset.pattern.permute.xlu0 0
      %387 = vperm.xlu0 %386, %v341
      %v388 = vpop.permute.xlu0 %387
      %391 = vset.pattern.permute.xlu0 0
      %392 = vperm.xlu0 %391, %v342
      %v393 = vpop.permute.xlu0 %392
      %396 = vset.pattern.permute.xlu0 0
      %397 = vperm.xlu0 %396, %v343
      %v398 = vpop.permute.xlu0 %397
      %401 = vset.pattern.permute.xlu0 0
      %402 = vperm.xlu0 %401, %v344
      %v403 = vpop.permute.xlu0 %402
      %406 = vset.pattern.permute.xlu0 0
      %407 = vperm.xlu0 %406, %v345
      %v408 = vpop.permute.xlu0 %407
      %411 = vset.pattern.permute.xlu0 0
      %412 = vperm.xlu0 %411, %v346
      %v413 = vpop.permute.xlu0 %412
      %416 = vset.pattern.permute.xlu0 0
      %417 = vperm.xlu0 %416, %v347
      %v418 = vpop.permute.xlu0 %417
      %421 = vset.pattern.permute.xlu0 0
      %422 = vperm.xlu0 %421, %v348
      %v423 = vpop.permute.xlu0 %422
      %426 = vset.pattern.permute.xlu0 0
      %427 = vperm.xlu0 %426, %v349
      %v428 = vpop.permute.xlu0 %427
      %v430 = vmul.f32 %v318, %v353
      %v431 = vmul.f32 %v319, %v358
      %v432 = vmul.f32 %v320, %v363
      %v433 = vmul.f32 %v321, %v368
      %v434 = vmul.f32 %v322, %v373
      %v435 = vmul.f32 %v323, %v378
      %v436 = vmul.f32 %v324, %v383
      %v437 = vmul.f32 %v325, %v388
      %v438 = vmul.f32 %v326, %v393
      %v439 = vmul.f32 %v327, %v398
      %v440 = vmul.f32 %v328, %v403
      %v441 = vmul.f32 %v329, %v408
      %v442 = vmul.f32 %v330, %v413
      %v443 = vmul.f32 %v331, %v418
      %v444 = vmul.f32 %v332, %v423
      %v445 = vmul.f32 %v333, %v428
      %v446 = vpack.c.bf16 %v431, %v430
      %v447 = vpack.c.bf16 %v433, %v432
      %v448 = vpack.c.bf16 %v435, %v434
      %v449 = vpack.c.bf16 %v437, %v436
      %v450 = vpack.c.bf16 %v439, %v438
      %v451 = vpack.c.bf16 %v441, %v440
      %v452 = vpack.c.bf16 %v443, %v442
      %v453 = vpack.c.bf16 %v445, %v444
      %v454 = vld [vmem:[#allocation6] sm:$0xf]
      %v455 = vld [vmem:[#allocation6 + $0x4] sm:$0xf]
      %v456 = vld [vmem:[#allocation6 + $0x8] sm:$0xf]
      %v457 = vld [vmem:[#allocation6 + $0xc] sm:$0xf]
      %v458 = vld [vmem:[#allocation6 + $0x10] sm:$0xf]
      %v459 = vld [vmem:[#allocation6 + $0x14] sm:$0xf]
      %v460 = vld [vmem:[#allocation6 + $0x18] sm:$0xf]
      %v461 = vld [vmem:[#allocation6 + $0x1c] sm:$0xf]
      %v462 = vld [vmem:[#allocation6 + $0x20] sm:$0xf]
      %v463 = vld [vmem:[#allocation6 + $0x24] sm:$0xf]
      %v464 = vld [vmem:[#allocation6 + $0x28] sm:$0xf]
      %v465 = vld [vmem:[#allocation6 + $0x2c] sm:$0xf]
      %v466 = vld [vmem:[#allocation6 + $0x30] sm:$0xf]
      %v467 = vld [vmem:[#allocation6 + $0x34] sm:$0xf]
      %v468 = vld [vmem:[#allocation6 + $0x38] sm:$0xf]
      %v469 = vld [vmem:[#allocation6 + $0x3c] sm:$0xf]
      %v470 = vld [vmem:[%s3] sm:$0xf]
      %v471 = vld [vmem:[%s3 + $0x4] sm:$0xf]
      %v472 = vld [vmem:[%s3 + $0x8] sm:$0xf]
      %v473 = vld [vmem:[%s3 + $0xc] sm:$0xf]
      %v474 = vld [vmem:[%s3 + $0x10] sm:$0xf]
      %v475 = vld [vmem:[%s3 + $0x14] sm:$0xf]
      %v476 = vld [vmem:[%s3 + $0x18] sm:$0xf]
      %v477 = vld [vmem:[%s3 + $0x1c] sm:$0xf]
      %v478 = vld [vmem:[%s3 + $0x20] sm:$0xf]
      %v479 = vld [vmem:[%s3 + $0x24] sm:$0xf]
      %v480 = vld [vmem:[%s3 + $0x28] sm:$0xf]
      %v481 = vld [vmem:[%s3 + $0x2c] sm:$0xf]
      %v482 = vld [vmem:[%s3 + $0x30] sm:$0xf]
      %v483 = vld [vmem:[%s3 + $0x34] sm:$0xf]
      %v484 = vld [vmem:[%s3 + $0x38] sm:$0xf]
      %v485 = vld [vmem:[%s3 + $0x3c] sm:$0xf]
      %v486 = vld [vmem:[#allocation8] sm:$0xf]
      %v487 = vld [vmem:[#allocation8 + $0x4] sm:$0xf]
      %v488 = vld [vmem:[#allocation8 + $0x8] sm:$0xf]
      %v489 = vld [vmem:[#allocation8 + $0xc] sm:$0xf]
      %v490 = vld [vmem:[#allocation8 + $0x10] sm:$0xf]
      %v491 = vld [vmem:[#allocation8 + $0x14] sm:$0xf]
      %v492 = vld [vmem:[#allocation8 + $0x18] sm:$0xf]
      %v493 = vld [vmem:[#allocation8 + $0x1c] sm:$0xf]
      %v494 = vld [vmem:[#allocation8 + $0x20] sm:$0xf]
      %v495 = vld [vmem:[#allocation8 + $0x24] sm:$0xf]
      %v496 = vld [vmem:[#allocation8 + $0x28] sm:$0xf]
      %v497 = vld [vmem:[#allocation8 + $0x2c] sm:$0xf]
      %v498 = vld [vmem:[#allocation8 + $0x30] sm:$0xf]
      %v499 = vld [vmem:[#allocation8 + $0x34] sm:$0xf]
      %v500 = vld [vmem:[#allocation8 + $0x38] sm:$0xf]
      %v501 = vld [vmem:[#allocation8 + $0x3c] sm:$0xf]
      %v518 = vunpack.c.l.b16 %v470
      %v519 = vunpack.c.l.b16 %v471
      %v520 = vunpack.c.l.b16 %v472
      %v521 = vunpack.c.l.b16 %v473
      %v522 = vunpack.c.l.b16 %v474
      %v523 = vunpack.c.l.b16 %v475
      %v524 = vunpack.c.l.b16 %v476
      %v525 = vunpack.c.l.b16 %v477
      %v526 = vunpack.c.l.b16 %v478
      %v527 = vunpack.c.l.b16 %v479
      %v528 = vunpack.c.l.b16 %v480
      %v529 = vunpack.c.l.b16 %v481
      %v530 = vunpack.c.l.b16 %v482
      %v531 = vunpack.c.l.b16 %v483
      %v532 = vunpack.c.l.b16 %v484
      %v533 = vunpack.c.l.b16 %v485
      %v534 = vpack.c.b16 %v519, %v518
      %v535 = vpack.c.b16 %v521, %v520
      %v536 = vpack.c.b16 %v523, %v522
      %v537 = vpack.c.b16 %v525, %v524
      %v538 = vpack.c.b16 %v527, %v526
      %v539 = vpack.c.b16 %v529, %v528
      %v540 = vpack.c.b16 %v531, %v530
      %v541 = vpack.c.b16 %v533, %v532
      %v566 = vunpack.c.l.b16 %v486
      %v567 = vunpack.c.l.b16 %v487
      %v568 = vunpack.c.l.b16 %v488
      %v569 = vunpack.c.l.b16 %v489
      %v570 = vunpack.c.l.b16 %v490
      %v571 = vunpack.c.l.b16 %v491
      %v572 = vunpack.c.l.b16 %v492
      %v573 = vunpack.c.l.b16 %v493
      %v574 = vunpack.c.l.b16 %v494
      %v575 = vunpack.c.l.b16 %v495
      %v576 = vunpack.c.l.b16 %v496
      %v577 = vunpack.c.l.b16 %v497
      %v578 = vunpack.c.l.b16 %v498
      %v579 = vunpack.c.l.b16 %v499
      %v580 = vunpack.c.l.b16 %v500
      %v581 = vunpack.c.l.b16 %v501
      %v582 = vpack.c.b16 %v567, %v566
      %v583 = vpack.c.b16 %v569, %v568
      %v584 = vpack.c.b16 %v571, %v570
      %v585 = vpack.c.b16 %v573, %v572
      %v586 = vpack.c.b16 %v575, %v574
      %v587 = vpack.c.b16 %v577, %v576
      %v588 = vpack.c.b16 %v579, %v578
      %v589 = vpack.c.b16 %v581, %v580
      %598 = vmatprep.subr.bf16.mxu0 0
      %599 = vmatpush1.bf16.msra.mxu0 %v589
      %600 = vmatprep.subr.bf16.mxu0 0
      %601 = vmatpush1.bf16.msra.mxu0 %v588
      %602 = vmatprep.subr.bf16.mxu0 0
      %603 = vmatpush1.bf16.msra.mxu0 %v587
      %604 = vmatprep.subr.bf16.mxu0 0
      %605 = vmatpush1.bf16.msra.mxu0 %v586
      %606 = vmatprep.subr.bf16.mxu0 0
      %607 = vmatpush1.bf16.msra.mxu0 %v585
      %608 = vmatprep.subr.bf16.mxu0 0
      %609 = vmatpush1.bf16.msra.mxu0 %v584
      %610 = vmatprep.subr.bf16.mxu0 0
      %611 = vmatpush1.bf16.msra.mxu0 %v583
      %612 = vmatprep.subr.bf16.mxu0 0
      %613 = vmatpush1.bf16.msra.mxu0 %v582
      %614 = vmatprep.subr.bf16.mxu0 0
      %615 = vmatpush2.bf16.msra.mxu0 0
      %616 = vmatprep.subr.bf16.mxu0 0
      %617 = vmatpush2.bf16.msra.mxu0 0
      %618 = vmatprep.subr.bf16.mxu0 0
      %619 = vmatpush2.bf16.msra.mxu0 0
      %620 = vmatprep.subr.bf16.mxu0 0
      %621 = vmatpush2.bf16.msra.mxu0 0
      %622 = vmatprep.subr.bf16.mxu0 0
      %623 = vmatpush2.bf16.msra.mxu0 0
      %624 = vmatprep.subr.bf16.mxu0 0
      %625 = vmatpush2.bf16.msra.mxu0 0
      %626 = vmatprep.subr.bf16.mxu0 0
      %627 = vmatpush2.bf16.msra.mxu0 0
      %628 = vmatprep.subr.bf16.mxu0 0
      %629 = vmatpush2.bf16.msra.mxu0 0
      %630 = vmatprep.mubr.bf16.mxu0 0
      %631 = vmatmul.mubr.bf16.gmra.mxu0 %v534
      %v632 = vpop.f32.mrf.mxu0
      %v633 = vadd.f32 0.0, %v632
      %v634 = vpop.f32.mrf.mxu0
      %v635 = vpop.f32.mrf.mxu0
      %v636 = vadd.f32 0.0, %v635
      %v637 = vpop.f32.mrf.mxu0
      %638 = vmatprep.mubr.bf16.mxu0 0
      %639 = vmatmul.mubr.bf16.gmra.mxu0 %v535
      %v640 = vpop.f32.mrf.mxu0
      %v641 = vadd.f32 0.0, %v640
      %v642 = vpop.f32.mrf.mxu0
      %v643 = vpop.f32.mrf.mxu0
      %v644 = vadd.f32 0.0, %v643
      %v645 = vpop.f32.mrf.mxu0
      %646 = vmatprep.mubr.bf16.mxu0 0
      %647 = vmatmul.mubr.bf16.gmra.mxu0 %v536
      %v648 = vpop.f32.mrf.mxu0
      %v649 = vadd.f32 0.0, %v648
      %v650 = vpop.f32.mrf.mxu0
      %v651 = vpop.f32.mrf.mxu0
      %v652 = vadd.f32 0.0, %v651
      %v653 = vpop.f32.mrf.mxu0
      %654 = vmatprep.mubr.bf16.mxu0 0
      %655 = vmatmul.mubr.bf16.gmra.mxu0 %v537
      %v656 = vpop.f32.mrf.mxu0
      %v657 = vadd.f32 0.0, %v656
      %v658 = vpop.f32.mrf.mxu0
      %v659 = vpop.f32.mrf.mxu0
      %v660 = vadd.f32 0.0, %v659
      %v661 = vpop.f32.mrf.mxu0
      %662 = vmatprep.mubr.bf16.mxu0 0
      %663 = vmatmul.mubr.bf16.gmra.mxu0 %v538
      %v664 = vpop.f32.mrf.mxu0
      %v665 = vadd.f32 0.0, %v664
      %v666 = vpop.f32.mrf.mxu0
      %v667 = vpop.f32.mrf.mxu0
      %v668 = vadd.f32 0.0, %v667
      %v669 = vpop.f32.mrf.mxu0
      %670 = vmatprep.mubr.bf16.mxu0 0
      %671 = vmatmul.mubr.bf16.gmra.mxu0 %v539
      %v672 = vpop.f32.mrf.mxu0
      %v673 = vadd.f32 0.0, %v672
      %v674 = vpop.f32.mrf.mxu0
      %v675 = vpop.f32.mrf.mxu0
      %v676 = vadd.f32 0.0, %v675
      %v677 = vpop.f32.mrf.mxu0
      %678 = vmatprep.mubr.bf16.mxu0 0
      %679 = vmatmul.mubr.bf16.gmra.mxu0 %v540
      %v680 = vpop.f32.mrf.mxu0
      %v681 = vadd.f32 0.0, %v680
      %v682 = vpop.f32.mrf.mxu0
      %v683 = vpop.f32.mrf.mxu0
      %v684 = vadd.f32 0.0, %v683
      %v685 = vpop.f32.mrf.mxu0
      %686 = vmatprep.mubr.bf16.mxu0 0
      %687 = vmatmul.mubr.bf16.gmra.mxu0 %v541
      %v688 = vpop.f32.mrf.mxu0
      %v689 = vadd.f32 0.0, %v688
      %v690 = vpop.f32.mrf.mxu0
      %v691 = vpop.f32.mrf.mxu0
      %v692 = vadd.f32 0.0, %v691
      %v693 = vpop.f32.mrf.mxu0
      %694 = vdwg.mxu0
      %v711 = vunpack.c.l.b16 %v454
      %v712 = vunpack.c.l.b16 %v455
      %v713 = vunpack.c.l.b16 %v456
      %v714 = vunpack.c.l.b16 %v457
      %v715 = vunpack.c.l.b16 %v458
      %v716 = vunpack.c.l.b16 %v459
      %v717 = vunpack.c.l.b16 %v460
      %v718 = vunpack.c.l.b16 %v461
      %v719 = vunpack.c.l.b16 %v462
      %v720 = vunpack.c.l.b16 %v463
      %v721 = vunpack.c.l.b16 %v464
      %v722 = vunpack.c.l.b16 %v465
      %v723 = vunpack.c.l.b16 %v466
      %v724 = vunpack.c.l.b16 %v467
      %v725 = vunpack.c.l.b16 %v468
      %v726 = vunpack.c.l.b16 %v469
      %v727 = vpack.c.b16 %v712, %v711
      %v728 = vpack.c.b16 %v714, %v713
      %v729 = vpack.c.b16 %v716, %v715
      %v730 = vpack.c.b16 %v718, %v717
      %v731 = vpack.c.b16 %v720, %v719
      %v732 = vpack.c.b16 %v722, %v721
      %v733 = vpack.c.b16 %v724, %v723
      %v734 = vpack.c.b16 %v726, %v725
      %743 = vmatprep.subr.bf16.mxu0 0
      %744 = vmatpush1.bf16.msra.mxu0 %v734
      %745 = vmatprep.subr.bf16.mxu0 0
      %746 = vmatpush1.bf16.msra.mxu0 %v733
      %747 = vmatprep.subr.bf16.mxu0 0
      %748 = vmatpush1.bf16.msra.mxu0 %v732
      %749 = vmatprep.subr.bf16.mxu0 0
      %750 = vmatpush1.bf16.msra.mxu0 %v731
      %751 = vmatprep.subr.bf16.mxu0 0
      %752 = vmatpush1.bf16.msra.mxu0 %v730
      %753 = vmatprep.subr.bf16.mxu0 0
      %754 = vmatpush1.bf16.msra.mxu0 %v729
      %755 = vmatprep.subr.bf16.mxu0 0
      %756 = vmatpush1.bf16.msra.mxu0 %v728
      %757 = vmatprep.subr.bf16.mxu0 0
      %758 = vmatpush1.bf16.msra.mxu0 %v727
      %759 = vmatprep.subr.bf16.mxu0 0
      %760 = vmatpush2.bf16.msra.mxu0 0
      %761 = vmatprep.subr.bf16.mxu0 0
      %762 = vmatpush2.bf16.msra.mxu0 0
      %763 = vmatprep.subr.bf16.mxu0 0
      %764 = vmatpush2.bf16.msra.mxu0 0
      %765 = vmatprep.subr.bf16.mxu0 0
      %766 = vmatpush2.bf16.msra.mxu0 0
      %767 = vmatprep.subr.bf16.mxu0 0
      %768 = vmatpush2.bf16.msra.mxu0 0
      %769 = vmatprep.subr.bf16.mxu0 0
      %770 = vmatpush2.bf16.msra.mxu0 0
      %771 = vmatprep.subr.bf16.mxu0 0
      %772 = vmatpush2.bf16.msra.mxu0 0
      %773 = vmatprep.subr.bf16.mxu0 0
      %774 = vmatpush2.bf16.msra.mxu0 0
      %775 = vmatprep.mubr.bf16.mxu0 0
      %776 = vmatmul.mubr.bf16.gmra.mxu0 %v446
      %v777 = vpop.f32.mrf.mxu0
      %v778 = vadd.f32 %v633, %v777
      %v779 = vpop.f32.mrf.mxu0
      %v780 = vpop.f32.mrf.mxu0
      %v781 = vadd.f32 %v636, %v780
      %v782 = vpop.f32.mrf.mxu0
      %783 = vmatprep.mubr.bf16.mxu0 0
      %784 = vmatmul.mubr.bf16.gmra.mxu0 %v447
      %v785 = vpop.f32.mrf.mxu0
      %v786 = vadd.f32 %v641, %v785
      %v787 = vpop.f32.mrf.mxu0
      %v788 = vpop.f32.mrf.mxu0
      %v789 = vadd.f32 %v644, %v788
      %v790 = vpop.f32.mrf.mxu0
      %791 = vmatprep.mubr.bf16.mxu0 0
      %792 = vmatmul.mubr.bf16.gmra.mxu0 %v448
      %v793 = vpop.f32.mrf.mxu0
      %v794 = vadd.f32 %v649, %v793
      %v795 = vpop.f32.mrf.mxu0
      %v796 = vpop.f32.mrf.mxu0
      %v797 = vadd.f32 %v652, %v796
      %v798 = vpop.f32.mrf.mxu0
      %799 = vmatprep.mubr.bf16.mxu0 0
      %800 = vmatmul.mubr.bf16.gmra.mxu0 %v449
      %v801 = vpop.f32.mrf.mxu0
      %v802 = vadd.f32 %v657, %v801
      %v803 = vpop.f32.mrf.mxu0
      %v804 = vpop.f32.mrf.mxu0
      %v805 = vadd.f32 %v660, %v804
      %v806 = vpop.f32.mrf.mxu0
      %807 = vmatprep.mubr.bf16.mxu0 0
      %808 = vmatmul.mubr.bf16.gmra.mxu0 %v450
      %v809 = vpop.f32.mrf.mxu0
      %v810 = vadd.f32 %v665, %v809
      %v811 = vpop.f32.mrf.mxu0
      %v812 = vpop.f32.mrf.mxu0
      %v813 = vadd.f32 %v668, %v812
      %v814 = vpop.f32.mrf.mxu0
      %815 = vmatprep.mubr.bf16.mxu0 0
      %816 = vmatmul.mubr.bf16.gmra.mxu0 %v451
      %v817 = vpop.f32.mrf.mxu0
      %v818 = vadd.f32 %v673, %v817
      %v819 = vpop.f32.mrf.mxu0
      %v820 = vpop.f32.mrf.mxu0
      %v821 = vadd.f32 %v676, %v820
      %v822 = vpop.f32.mrf.mxu0
      %823 = vmatprep.mubr.bf16.mxu0 0
      %824 = vmatmul.mubr.bf16.gmra.mxu0 %v452
      %v825 = vpop.f32.mrf.mxu0
      %v826 = vadd.f32 %v681, %v825
      %v827 = vpop.f32.mrf.mxu0
      %v828 = vpop.f32.mrf.mxu0
      %v829 = vadd.f32 %v684, %v828
      %v830 = vpop.f32.mrf.mxu0
      %831 = vmatprep.mubr.bf16.mxu0 0
      %832 = vmatmul.mubr.bf16.gmra.mxu0 %v453
      %v833 = vpop.f32.mrf.mxu0
      %v834 = vadd.f32 %v689, %v833
      %v835 = vpop.f32.mrf.mxu0
      %v836 = vpop.f32.mrf.mxu0
      %v837 = vadd.f32 %v692, %v836
      %v838 = vpop.f32.mrf.mxu0
      %839 = vdwg.mxu0
      %v840 = vld [vmem:[%s6] sm:$0x1]
      %v842 = vlaneseq
      %v843 = vshrl.u32 %v842, 7
      %v844 = vsub.s32 0, %v843
      %v845 = vrot.slane %v840, %v844
      %v847 = vadd.f32 %v778, %v845
      %v848 = vadd.f32 %v781, %v845
      %v849 = vadd.f32 %v786, %v845
      %v850 = vadd.f32 %v789, %v845
      %v851 = vadd.f32 %v794, %v845
      %v852 = vadd.f32 %v797, %v845
      %v853 = vadd.f32 %v802, %v845
      %v854 = vadd.f32 %v805, %v845
      %v855 = vadd.f32 %v810, %v845
      %v856 = vadd.f32 %v813, %v845
      %v857 = vadd.f32 %v818, %v845
      %v858 = vadd.f32 %v821, %v845
      %v859 = vadd.f32 %v826, %v845
      %v860 = vadd.f32 %v829, %v845
      %v861 = vadd.f32 %v834, %v845
      %v862 = vadd.f32 %v837, %v845
      %v863 = vmax.f32 %v847, 0.0
      %v864 = vmax.f32 %v848, 0.0
      %v865 = vmax.f32 %v849, 0.0
      %v866 = vmax.f32 %v850, 0.0
      %v867 = vmax.f32 %v851, 0.0
      %v868 = vmax.f32 %v852, 0.0
      %v869 = vmax.f32 %v853, 0.0
      %v870 = vmax.f32 %v854, 0.0
      %v871 = vmax.f32 %v855, 0.0
      %v872 = vmax.f32 %v856, 0.0
      %v873 = vmax.f32 %v857, 0.0
      %v874 = vmax.f32 %v858, 0.0
      %v875 = vmax.f32 %v859, 0.0
      %v876 = vmax.f32 %v860, 0.0
      %v877 = vmax.f32 %v861, 0.0
      %v878 = vmax.f32 %v862, 0.0
      %v879 = vpack.c.bf16 %v864, %v863
      %v880 = vpack.c.bf16 %v866, %v865
      %v881 = vpack.c.bf16 %v868, %v867
      %v882 = vpack.c.bf16 %v870, %v869
      %v883 = vpack.c.bf16 %v872, %v871
      %v884 = vpack.c.bf16 %v874, %v873
      %v885 = vpack.c.bf16 %v876, %v875
      %v886 = vpack.c.bf16 %v878, %v877
      %v895 = vunpack.c.l.b16 %v879
      %v896 = vunpack.c.h.b16 %v879
      %v897 = vunpack.c.l.b16 %v880
      %v898 = vunpack.c.h.b16 %v880
      %v899 = vunpack.c.l.b16 %v881
      %v900 = vunpack.c.h.b16 %v881
      %v901 = vunpack.c.l.b16 %v882
      %v902 = vunpack.c.h.b16 %v882
      %v903 = vunpack.c.l.b16 %v883
      %v904 = vunpack.c.h.b16 %v883
      %v905 = vunpack.c.l.b16 %v884
      %v906 = vunpack.c.h.b16 %v884
      %v907 = vunpack.c.l.b16 %v885
      %v908 = vunpack.c.h.b16 %v885
      %v909 = vunpack.c.l.b16 %v886
      %v910 = vunpack.c.h.b16 %v886
      %v911 = vpack.c.b16 %v895, %v895
      %v912 = vpack.c.b16 %v896, %v896
      %v913 = vpack.c.b16 %v897, %v897
      %v914 = vpack.c.b16 %v898, %v898
      %v915 = vpack.c.b16 %v899, %v899
      %v916 = vpack.c.b16 %v900, %v900
      %v917 = vpack.c.b16 %v901, %v901
      %v918 = vpack.c.b16 %v902, %v902
      %v919 = vpack.c.b16 %v903, %v903
      %v920 = vpack.c.b16 %v904, %v904
      %v921 = vpack.c.b16 %v905, %v905
      %v922 = vpack.c.b16 %v906, %v906
      %v923 = vpack.c.b16 %v907, %v907
      %v924 = vpack.c.b16 %v908, %v908
      %v925 = vpack.c.b16 %v909, %v909
      %v926 = vpack.c.b16 %v910, %v910
      %943 = vst [vmem:[#allocation9] sm:$0xf] %v911
      %944 = vst [vmem:[#allocation9 + $0x4] sm:$0xf] %v912
      %945 = vst [vmem:[#allocation9 + $0x8] sm:$0xf] %v913
      %946 = vst [vmem:[#allocation9 + $0xc] sm:$0xf] %v914
      %947 = vst [vmem:[#allocation9 + $0x10] sm:$0xf] %v915
      %948 = vst [vmem:[#allocation9 + $0x14] sm:$0xf] %v916
      %949 = vst [vmem:[#allocation9 + $0x18] sm:$0xf] %v917
      %950 = vst [vmem:[#allocation9 + $0x1c] sm:$0xf] %v918
      %951 = vst [vmem:[#allocation9 + $0x20] sm:$0xf] %v919
      %952 = vst [vmem:[#allocation9 + $0x24] sm:$0xf] %v920
      %953 = vst [vmem:[#allocation9 + $0x28] sm:$0xf] %v921
      %954 = vst [vmem:[#allocation9 + $0x2c] sm:$0xf] %v922
      %955 = vst [vmem:[#allocation9 + $0x30] sm:$0xf] %v923
      %956 = vst [vmem:[#allocation9 + $0x34] sm:$0xf] %v924
      %957 = vst [vmem:[#allocation9 + $0x38] sm:$0xf] %v925
      %958 = vst [vmem:[#allocation9 + $0x3c] sm:$0xf] %v926
    $region49: #{tpu_custom_call.1} parent=1 // pred_fallthru
      _
    // Predicated region
    $region50: #{tpu_custom_call.1} parent=1 // pred_check
      _
    $region51: #{tpu_custom_call.1} parent=1 // pred_check_branch
      %960 = sbr.rel (0) target = $region53
    $region52: #{tpu_custom_call.1} parent=1 // pred_region
      %s962 = ssub.s32 1024, 1024
      %963 = vsyncadd [#allocation5], %s962
      %s964 = sshll.u32 [#allocation9], 4
      %s965 = int_to_ptr.vmem [resolvable:$true] %s964
      %970 = dma.vmem_to_hbm [thread:$0]  %s965, 1024, %s7, [#allocation5], 64, 64, 4
    $region53: #{tpu_custom_call.1} parent=1 // pred_fallthru
      _
    // Predicated region
    $region54: #{tpu_custom_call.1} parent=1 // pred_check
      _
    $region55: #{tpu_custom_call.1} parent=1 // pred_check_branch
      %972 = sbr.rel (0) target = $region57
    $region56: #{tpu_custom_call.1} parent=1 // pred_region
      %973 = dma.done [#allocation5], 1024
    $region57: #{tpu_custom_call.1} parent=1 // pred_fallthru
      _
    %974 = vsyncpa [#allocation4], 1
    %975 = vsyncpa [#allocation7], 1
    %976 = vsyncpa [#allocation5], 1

</llo_original>
